<compile_context>
chip_gen: v7x
topology: tpu7x:2x2x1
jax: 0.10.0
libtpu: 0.0.40
codegen_flags: <defaults>
</compile_context>

<pallas_src>
import functools

import jax
import jax.numpy as jnp
from jax.experimental import pallas as pl
from jax.experimental.pallas import tpu as pltpu


LANE = 128     # vreg lane width; use 256 if layer widths grow large on v6e/v7x


def _round_up(x, m):
    return ((x + m - 1) // m) * m


def _sublane(dtype):
    """Sublane packing granule for the second-to-last dim (dtype aware)."""
    bits = jnp.dtype(dtype).itemsize * 8
    return max(8, 256 // bits)      # 8 for f32, 16 for bf16, 32 for int8/fp8


def _actor_mlp_kernel(x_ref, w_ref, b_ref, o_ref, *, num_layers, d_in):
    """Fused MLP: x -> [Linear+ReLU]*(L-1) -> Linear+sigmoid.

    x_ref : (Bt, d_in)            activations (real, unpadded feature width)
    w_ref : (L, Dmax, Dmax)       stacked lane-padded weights (zero-padded)
    b_ref : (L, 1, Dmax)          stacked lane-padded bias rows (zero-padded)
    o_ref : (Bt, out_pad)         lane-dense output block
    All intermediates stay in vregs/VMEM; nothing round-trips through HBM.
    """
    param_dtype = w_ref.dtype
    x = x_ref[...]                                   # no forced upcast
    for l in range(num_layers):
        w = w_ref[l]                                 # (Dmax, Dmax)
        if l == 0 and d_in != w.shape[0]:
            # First layer: contract only over the real input width (the
            # remaining rows are zero padding anyway).
            w = w[:d_in, :]
        b = b_ref[l]                                 # (1, Dmax) broadcast row
        # MXU matmul with f32 accumulation + VPU bias add.
        x = jnp.dot(x, w, preferred_element_type=jnp.float32) + b
        if l < num_layers - 1:
            x = jnp.maximum(x, 0.0).astype(param_dtype)   # ReLU, back to param dtype
        else:
            x = jax.nn.sigmoid(x)                         # EUP transcendental
    o_ref[...] = x[:, : o_ref.shape[-1]].astype(o_ref.dtype)


def init_actor_params(key, h_sizes, output_size, dtype=jnp.float32):
    """Init mirroring nn.Linear default (U[-1/sqrt(fan_in), +1/sqrt(fan_in)]).

    Returns list of (W, b) with W shaped (in_features, out_features).
    """
    dims = list(h_sizes) + [output_size]
    params = []
    for k in range(len(dims) - 1):
        fan_in, fan_out = dims[k], dims[k + 1]
        key, kw, kb = jax.random.split(key, 3)
        bound = 1.0 / jnp.sqrt(jnp.asarray(fan_in, dtype))
        w = jax.random.uniform(kw, (fan_in, fan_out), dtype, -bound, bound)
        b = jax.random.uniform(kb, (fan_out,), dtype, -bound, bound)
        params.append((w, b))
    return params


def pack_actor_params(params, lane=LANE):
    """One-time layout prep: zero-pad every layer width to a multiple of `lane`
    and stack all weights / biases into single arrays so the kernel needs only
    two parameter DMAs.  Returns (w_stack (L,Dmax,Dmax), b_stack (L,1,Dmax)).
    """
    num_layers = len(params)
    dims = [params[0][0].shape[0]] + [w.shape[1] for w, _ in params]
    dmax = max(_round_up(d, lane) for d in dims)
    w_dtype = params[0][0].dtype
    w_stack = jnp.zeros((num_layers, dmax, dmax), w_dtype)
    b_stack = jnp.zeros((num_layers, 1, dmax), w_dtype)
    for l, (w, b) in enumerate(params):
        w_stack = w_stack.at[l, : w.shape[0], : w.shape[1]].set(w)
        b_stack = b_stack.at[l, 0, : b.shape[0]].set(b)
    return w_stack, b_stack


def actor_forward(state, w_stack, b_stack, output_size, *, batch_tile=2048):
    """Forward pass matching Actor.forward, as a single fused Pallas kernel."""
    B, d_in = state.shape
    num_layers, dmax, _ = w_stack.shape
    out_pad = _round_up(output_size, LANE)           # lane-dense output width
    out_dtype = state.dtype

    kernel = functools.partial(_actor_mlp_kernel, num_layers=num_layers, d_in=d_in)

    if B <= batch_tile:
        # Small batch (RL rollout / inference): whole-array VMEM blocks, no
        # grid -> no pipeline machinery, 3 input DMAs + 1 output DMA total.
        sub = _sublane(out_dtype)
        b_pad = _round_up(max(B, sub), sub)
        x = state if b_pad == B else jnp.pad(state, ((0, b_pad - B), (0, 0)))
        vmem = pl.BlockSpec(memory_space=pltpu.MemorySpace.VMEM)
        y = pl.pallas_call(
            kernel,
            out_shape=jax.ShapeDtypeStruct((b_pad, out_pad), out_dtype),
            in_specs=[vmem, vmem, vmem],
            out_specs=vmem,
        )(x, w_stack, b_stack)
    else:
        # Large batch (replay-buffer evaluation): batch-tiled "parallel" grid.
        # No wrapper-side pad of `state`: pl.cdiv grid + ragged last tile
        # (per-row independent compute; OOB output rows are discarded).
        # B > batch_tile here, so n_tiles >= 2 and both v7x TCs get work.
        n_tiles = pl.cdiv(B, batch_tile)
        # Note: weights are tiny (<1 MiB) so constant-index full-block VMEM
        # residency with default buffering is fine on all generations; switch
        # to K/N-tiled specs (and fewer buffers) only if widths grow to ~2048+.
        y = pl.pallas_call(
            kernel,
            out_shape=jax.ShapeDtypeStruct((B, out_pad), out_dtype),
            grid=(n_tiles,),
            in_specs=[
                pl.BlockSpec((batch_tile, d_in), lambda i: (i, 0)),
                pl.BlockSpec((num_layers, dmax, dmax), lambda i: (0, 0, 0)),
                pl.BlockSpec((num_layers, 1, dmax), lambda i: (0, 0, 0)),
            ],
            out_specs=pl.BlockSpec((batch_tile, out_pad), lambda i: (i, 0)),
            compiler_params=pltpu.CompilerParams(
                dimension_semantics=("parallel",)),
        )(state, w_stack, b_stack)

    # Padded output columns hold sigmoid(0)=0.5; slice back to the real shape.
    return y[:B, :output_size]


def actor_forward_ref(state, params):
    """Pure-JAX reference for correctness checking (uses un-packed params)."""
    x = state
    for (w, b) in params[:-1]:
        x = jnp.maximum(x @ w + b, 0.0)
    w, b = params[-1]
    return jax.nn.sigmoid(x @ w + b)


if __name__ == "__main__":
    key = jax.random.PRNGKey(0)

    # Small shapes consistent with the module: state dim 16, two hidden layers,
    # 8 actions, batch 2 for the rollout path.
    h_sizes = [16, 32, 32]
    output_size = 8
    batch = 2

    kp, kx, kx2 = jax.random.split(key, 3)
    params = init_actor_params(kp, h_sizes, output_size)
    w_stack, b_stack = pack_actor_params(params)

    # --- Small-batch (rollout) path: single whole-array VMEM block ---
    state = jax.random.normal(kx, (batch, h_sizes[0]), jnp.float32)
    out = actor_forward(state, w_stack, b_stack, output_size)
    out = jax.block_until_ready(out)
    ref = actor_forward_ref(state, params)
    assert out.shape == (batch, output_size)
    assert jnp.allclose(out, ref, atol=5e-3, rtol=1e-3), "small-batch mismatch vs reference"

    # --- Large-batch path: batch-tiled 'parallel' grid with a ragged last tile ---
    big_b = 2050
    state_big = jax.random.normal(kx2, (big_b, h_sizes[0]), jnp.float32)
    out_big = actor_forward(state_big, w_stack, b_stack, output_size, batch_tile=1024)
    out_big = jax.block_until_ready(out_big)
    ref_big = actor_forward_ref(state_big, params)
    assert out_big.shape == (big_b, output_size)
    assert jnp.allclose(out_big, ref_big, atol=5e-3, rtol=1e-3), "large-batch mismatch vs reference"

    print("KERNEL_OK")
</pallas_src>

<mosaic_0001>
module attributes {stable_mosaic.version = 11 : i64} {
  func.func @_actor_mlp_kernel(%arg0: memref<8x16xf32, #tpu.memory_space<vmem>>, %arg1: memref<3x128x128xf32, #tpu.memory_space<vmem>>, %arg2: memref<3x1x128xf32, #tpu.memory_space<vmem>>, %arg3: memref<8x128xf32, #tpu.memory_space<vmem>>) attributes {dimension_semantics = [], scalar_prefetch = 0 : i64, scratch_operands = 0 : i64, tpu.core_type = #tpu.core_type<tc>} {
    %c0 = arith.constant 0 : index
    %c0_0 = arith.constant 0 : index
    %0 = vector.load %arg0[%c0, %c0_0] : memref<8x16xf32, #tpu.memory_space<vmem>>, vector<8x16xf32>
    %c0_1 = arith.constant 0 : index
    %c0_2 = arith.constant 0 : index
    %c0_3 = arith.constant 0 : index
    %1 = vector.load %arg1[%c0_1, %c0_2, %c0_3] : memref<3x128x128xf32, #tpu.memory_space<vmem>>, vector<1x128x128xf32>
    %2 = vector.shape_cast %1 : vector<1x128x128xf32> to vector<128x128xf32>
    %3 = vector.extract_strided_slice %2 {offsets = [0, 0], sizes = [16, 128], strides = [1, 1]} : vector<128x128xf32> to vector<16x128xf32>
    %c0_4 = arith.constant 0 : index
    %c0_5 = arith.constant 0 : index
    %c0_6 = arith.constant 0 : index
    %4 = vector.load %arg2[%c0_4, %c0_5, %c0_6] : memref<3x1x128xf32, #tpu.memory_space<vmem>>, vector<1x1x128xf32>
    %5 = vector.shape_cast %4 : vector<1x1x128xf32> to vector<1x128xf32>
    %cst = arith.constant dense<0.000000e+00> : vector<8x128xf32>
    %6 = tpu.matmul %0, %3, %cst {dimension_numbers = #tpu.dot_dimension_numbers<[1], [0], [0], [1], [0, 0, 1, 1], [], []>} : vector<8x16xf32>, vector<16x128xf32>, vector<8x128xf32> -> vector<8x128xf32>
    %7 = vector.broadcast %5 : vector<1x128xf32> to vector<8x128xf32>
    %8 = arith.addf %6, %7 : vector<8x128xf32>
    %cst_7 = arith.constant 0.000000e+00 : f32
    %9 = vector.broadcast %cst_7 : f32 to vector<8x128xf32>
    %10 = arith.maximumf %8, %9 : vector<8x128xf32>
    %c1 = arith.constant 1 : index
    %c0_8 = arith.constant 0 : index
    %c0_9 = arith.constant 0 : index
    %11 = vector.load %arg1[%c1, %c0_8, %c0_9] : memref<3x128x128xf32, #tpu.memory_space<vmem>>, vector<1x128x128xf32>
    %12 = vector.shape_cast %11 : vector<1x128x128xf32> to vector<128x128xf32>
    %c1_10 = arith.constant 1 : index
    %c0_11 = arith.constant 0 : index
    %c0_12 = arith.constant 0 : index
    %13 = vector.load %arg2[%c1_10, %c0_11, %c0_12] : memref<3x1x128xf32, #tpu.memory_space<vmem>>, vector<1x1x128xf32>
    %14 = vector.shape_cast %13 : vector<1x1x128xf32> to vector<1x128xf32>
    %cst_13 = arith.constant dense<0.000000e+00> : vector<8x128xf32>
    %15 = tpu.matmul %10, %12, %cst_13 {dimension_numbers = #tpu.dot_dimension_numbers<[1], [0], [0], [1], [0, 0, 1, 1], [], []>} : vector<8x128xf32>, vector<128x128xf32>, vector<8x128xf32> -> vector<8x128xf32>
    %16 = vector.broadcast %14 : vector<1x128xf32> to vector<8x128xf32>
    %17 = arith.addf %15, %16 : vector<8x128xf32>
    %cst_14 = arith.constant 0.000000e+00 : f32
    %18 = vector.broadcast %cst_14 : f32 to vector<8x128xf32>
    %19 = arith.maximumf %17, %18 : vector<8x128xf32>
    %c2 = arith.constant 2 : index
    %c0_15 = arith.constant 0 : index
    %c0_16 = arith.constant 0 : index
    %20 = vector.load %arg1[%c2, %c0_15, %c0_16] : memref<3x128x128xf32, #tpu.memory_space<vmem>>, vector<1x128x128xf32>
    %21 = vector.shape_cast %20 : vector<1x128x128xf32> to vector<128x128xf32>
    %c2_17 = arith.constant 2 : index
    %c0_18 = arith.constant 0 : index
    %c0_19 = arith.constant 0 : index
    %22 = vector.load %arg2[%c2_17, %c0_18, %c0_19] : memref<3x1x128xf32, #tpu.memory_space<vmem>>, vector<1x1x128xf32>
    %23 = vector.shape_cast %22 : vector<1x1x128xf32> to vector<1x128xf32>
    %cst_20 = arith.constant dense<0.000000e+00> : vector<8x128xf32>
    %24 = tpu.matmul %19, %21, %cst_20 {dimension_numbers = #tpu.dot_dimension_numbers<[1], [0], [0], [1], [0, 0, 1, 1], [], []>} : vector<8x128xf32>, vector<128x128xf32>, vector<8x128xf32> -> vector<8x128xf32>
    %25 = vector.broadcast %23 : vector<1x128xf32> to vector<8x128xf32>
    %26 = arith.addf %24, %25 : vector<8x128xf32>
    %27 = arith.negf %26 : vector<8x128xf32>
    %28 = math.exp %27 : vector<8x128xf32>
    %cst_21 = arith.constant 1.000000e+00 : f32
    %29 = vector.broadcast %cst_21 : f32 to vector<8x128xf32>
    %30 = arith.addf %29, %28 : vector<8x128xf32>
    %31 = arith.divf %29, %30 : vector<8x128xf32>
    %c0_22 = arith.constant 0 : index
    %c0_23 = arith.constant 0 : index
    %32 = vector.load %arg3[%c0_22, %c0_23] : memref<8x128xf32, #tpu.memory_space<vmem>>, vector<8x128xf32>
    tpu.vector_store %arg3[%c0_22, %c0_23], %31 {strides = array<i32>} : memref<8x128xf32, #tpu.memory_space<vmem>>, vector<8x128xf32>,
    return
  }
}

</mosaic_0001>

<llo_original>
// kernel: tpu_custom_call.1
$region0: #{tpu_custom_call.1}
  #allocation0 [shape = 'u32[]', space=smem, size = 0x4, offset = 0x4, fixed_abs, tag = 'smem constant byte address 0x4 - core index']
  #allocation1 [shape = 'u32[144,128]{1,0:T(1,128)}', space=vmem, size = 0x12000, scoped, tag = 'internal scratch']
  %s0 = inlined_call_operand.hbm [shape: f32[8,16], index: 0, kind: input, shape index: {}]
  %s1 = inlined_call_operand.hbm [shape: f32[3,128,128], index: 1, kind: input, shape index: {}]
  %s2 = inlined_call_operand.vmem [shape: f32[3,1,128], index: 2, kind: input, shape index: {}]
  %s3 = inlined_call_operand.hbm [shape: f32[8,128], index: 3, kind: output, shape index: {}]
  %s4 = sld [smem:[#allocation0]]
  $region30: #{tpu_custom_call.1} parent=0
    _
  %s6 = ssub.s32 1, %s4
  %s7 = scalar_select 0, %s6, %s4
  $region1: #{tpu_custom_call.1} parent=0
    #allocation2 [shape = 'u8[4096]{0}', space=vmem, size = 0x1000, scoped, tag = 'input window, operand 0, single buffered']
    #allocation3 [shape = 's32[1]{0}', space=sflag, size = 0x4, scoped, tag = 'scoped memory for tpu_custom_call.1']
    #allocation4 [shape = 's32[1]{0}', space=sflag, size = 0x4, scoped, tag = 'scoped memory for tpu_custom_call.1']
    #allocation5 [shape = 'u8[196608]{0}', space=vmem, size = 0x30000, scoped, tag = 'input window, operand 1, single buffered']
    #allocation6 [shape = 's32[1]{0}', space=sflag, size = 0x4, scoped, tag = 'scoped memory for tpu_custom_call.1']
    #allocation7 [shape = 'u8[4096]{0}', space=vmem, size = 0x1000, scoped, tag = 'output window, operand 0, single buffered']
    %8 = vsyncpa [#allocation3], 0
    %9 = vsyncpa [#allocation6], 0
    %10 = vsyncpa [#allocation4], 0
    // Predicated region
    $region2: #{tpu_custom_call.1} parent=1 // pred_check
      _
    $region3: #{tpu_custom_call.1} parent=1 // pred_check_branch
      %12 = sbr.rel (0) target = $region5
    $region4: #{tpu_custom_call.1} parent=1 // pred_region
      %s14 = ssub.s32 128, 128
      %15 = vsyncadd [#allocation3], %s14
      %s17 = sshll.u32 [#allocation2], 4
      %s18 = int_to_ptr.vmem [resolvable:$true] %s17
      %20 = dma.hbm_to_vmem [thread:$0]  %s0, 128, %s18, [#allocation3]
    $region5: #{tpu_custom_call.1} parent=1 // pred_fallthru
      _
    // Predicated region
    $region6: #{tpu_custom_call.1} parent=1 // pred_check
      _
    $region7: #{tpu_custom_call.1} parent=1 // pred_check_branch
      %22 = sbr.rel (0) target = $region9
    $region8: #{tpu_custom_call.1} parent=1 // pred_region
      %s24 = ssub.s32 6144, 6144
      %25 = vsyncadd [#allocation6], %s24
      %s26 = sshll.u32 [#allocation5], 4
      %s27 = int_to_ptr.vmem [resolvable:$true] %s26
      %32 = dma.hbm_to_vmem [thread:$0]  %s1, 6144, %s27, [#allocation6], 128, 128, 8
    $region9: #{tpu_custom_call.1} parent=1 // pred_fallthru
      _
    // Predicated region
    $region10: #{tpu_custom_call.1} parent=1 // pred_check
      _
    $region11: #{tpu_custom_call.1} parent=1 // pred_check_branch
      %34 = sbr.rel (0) target = $region13
    $region12: #{tpu_custom_call.1} parent=1 // pred_region
      _
    $region13: #{tpu_custom_call.1} parent=1 // pred_fallthru
      _
    // Predicated region
    $region14: #{tpu_custom_call.1} parent=1 // pred_check
      _
    $region15: #{tpu_custom_call.1} parent=1 // pred_check_branch
      %36 = sbr.rel (0) target = $region17
    $region16: #{tpu_custom_call.1} parent=1 // pred_region
      %37 = dma.done [#allocation3], 128
    $region17: #{tpu_custom_call.1} parent=1 // pred_fallthru
      _
    // Predicated region
    $region18: #{tpu_custom_call.1} parent=1 // pred_check
      _
    $region19: #{tpu_custom_call.1} parent=1 // pred_check_branch
      %39 = sbr.rel (0) target = $region21
    $region20: #{tpu_custom_call.1} parent=1 // pred_region
      %40 = dma.done [#allocation6], 6144
    $region21: #{tpu_custom_call.1} parent=1 // pred_fallthru
      _
    %v41 = vld [vmem:[#allocation2] sm:$0xff]
    %v42 = vld [vmem:[#allocation5] sm:$0xff]
    %v43 = vld [vmem:[#allocation5 + $0x8] sm:$0xff]
    %v44 = vld [vmem:[%s2] sm:$0x1]
    %v46 = vlaneseq
    %v47 = vshrl.u32 %v46, 7
    %v48 = vsub.s32 0, %v47
    %v49 = vrot.slane %v44, %v48
    %vm51 = vcmask 130048
    %v53 = vsel %vm51, %v41, 0
    %55 = vmatprep.subr.mxu0 0.0
    %56 = vmatpush1.msra.mxu0 %v42
    %57 = vmatprep.subr.mxu0 0.0
    %58 = vmatpush1.msra.mxu0 %v43
    %59 = vmatprep.subr.mxu0 0.0
    %60 = vmatpush1.msra.mxu0 0.0
    %61 = vmatprep.subr.mxu0 0.0
    %62 = vmatpush1.msra.mxu0 0.0
    %63 = vmatprep.subr.mxu0 0.0
    %64 = vmatpush1.msra.mxu0 0.0
    %65 = vmatprep.subr.mxu0 0.0
    %66 = vmatpush1.msra.mxu0 0.0
    %67 = vmatprep.subr.mxu0 0.0
    %68 = vmatpush1.msra.mxu0 0.0
    %69 = vmatprep.subr.mxu0 0.0
    %70 = vmatpush1.msra.mxu0 0.0
    %71 = vmatprep.subr.mxu0 0.0
    %72 = vmatpush1.msra.mxu0 0.0
    %73 = vmatprep.subr.mxu0 0.0
    %74 = vmatpush1.msra.mxu0 0.0
    %75 = vmatprep.subr.mxu0 0.0
    %76 = vmatpush1.msra.mxu0 0.0
    %77 = vmatprep.subr.mxu0 0.0
    %78 = vmatpush1.msra.mxu0 0.0
    %79 = vmatprep.subr.mxu0 0.0
    %80 = vmatpush1.msra.mxu0 0.0
    %81 = vmatprep.subr.mxu0 0.0
    %82 = vmatpush1.msra.mxu0 0.0
    %83 = vmatprep.subr.mxu0 0.0
    %84 = vmatpush1.msra.mxu0 0.0
    %85 = vmatprep.subr.mxu0 0.0
    %86 = vmatpush1.msra.mxu0 0.0
    %87 = vmatprep.subr.mxu0 0.0
    %88 = vmatpush1.msra.mxu0 0.0
    %89 = vmatprep.subr.mxu0 0.0
    %90 = vmatpush1.msra.mxu0 0.0
    %91 = vmatprep.subr.mxu0 0.0
    %92 = vmatpush1.msra.mxu0 0.0
    %93 = vmatprep.subr.mxu0 0.0
    %94 = vmatpush1.msra.mxu0 0.0
    %95 = vmatprep.subr.mxu0 0.0
    %96 = vmatpush1.msra.mxu0 0.0
    %97 = vmatprep.subr.mxu0 0.0
    %98 = vmatpush1.msra.mxu0 0.0
    %99 = vmatprep.subr.mxu0 0.0
    %100 = vmatpush1.msra.mxu0 0.0
    %101 = vmatprep.subr.mxu0 0.0
    %102 = vmatpush1.msra.mxu0 0.0
    %103 = vmatprep.subr.mxu0 0.0
    %104 = vmatpush1.msra.mxu0 0.0
    %105 = vmatprep.subr.mxu0 0.0
    %106 = vmatpush1.msra.mxu0 0.0
    %107 = vmatprep.subr.mxu0 0.0
    %108 = vmatpush1.msra.mxu0 0.0
    %109 = vmatprep.subr.mxu0 0.0
    %110 = vmatpush1.msra.mxu0 0.0
    %111 = vmatprep.subr.mxu0 0.0
    %112 = vmatpush1.msra.mxu0 0.0
    %113 = vmatprep.subr.mxu0 0.0
    %114 = vmatpush1.msra.mxu0 0.0
    %115 = vmatprep.subr.mxu0 0.0
    %116 = vmatpush1.msra.mxu0 0.0
    %117 = vmatprep.subr.mxu0 0.0
    %118 = vmatpush1.msra.mxu0 0.0
    %119 = vmatprep.mubr.f32.mxu0 0.0
    %120 = vmatmul.mubr.f32.gmra.mrb[0].mxu0 %v53
    %v121 = vpop.f32.mrb[0].mxu0
    %v122 = vadd.f32 %v49, %v121
    %v123 = vpop.f32.mrb[0].mxu0
    %124 = vdwg.mxu0
    %v125 = vmax.f32 %v122, 0.0
    %s126 = scalar_lea.vmem [#allocation5], 128
    %v127 = vld [vmem:[%s126] sm:$0xff]
    %v128 = vld [vmem:[%s126 + $0x8] sm:$0xff]
    %v129 = vld [vmem:[%s126 + $0x10] sm:$0xff]
    %v130 = vld [vmem:[%s126 + $0x18] sm:$0xff]
    %v131 = vld [vmem:[%s126 + $0x20] sm:$0xff]
    %v132 = vld [vmem:[%s126 + $0x28] sm:$0xff]
    %v133 = vld [vmem:[%s126 + $0x30] sm:$0xff]
    %v134 = vld [vmem:[%s126 + $0x38] sm:$0xff]
    %v135 = vld [vmem:[%s126 + $0x40] sm:$0xff]
    %v136 = vld [vmem:[%s126 + $0x48] sm:$0xff]
    %v137 = vld [vmem:[%s126 + $0x50] sm:$0xff]
    %v138 = vld [vmem:[%s126 + $0x58] sm:$0xff]
    %v139 = vld [vmem:[%s126 + $0x60] sm:$0xff]
    %v140 = vld [vmem:[%s126 + $0x68] sm:$0xff]
    %v141 = vld [vmem:[%s126 + $0x70] sm:$0xff]
    %v142 = vld [vmem:[%s126 + $0x78] sm:$0xff]
    %s143 = scalar_lea.vmem %s2, 1
    %v144 = vld [vmem:[%s143] sm:$0x1]
    %v146 = vlaneseq
    %v147 = vshrl.u32 %v146, 7
    %v148 = vsub.s32 0, %v147
    %v149 = vrot.slane %v144, %v148
    %151 = vmatprep.subr.mxu0 0.0
    %152 = vmatpush1.msra.mxu0 %v127
    %153 = vmatprep.subr.mxu0 0.0
    %154 = vmatpush1.msra.mxu0 %v128
    %155 = vmatprep.subr.mxu0 0.0
    %156 = vmatpush1.msra.mxu0 %v129
    %157 = vmatprep.subr.mxu0 0.0
    %158 = vmatpush1.msra.mxu0 %v130
    %159 = vmatprep.subr.mxu0 0.0
    %160 = vmatpush1.msra.mxu0 %v131
    %161 = vmatprep.subr.mxu0 0.0
    %162 = vmatpush1.msra.mxu0 %v132
    %163 = vmatprep.subr.mxu0 0.0
    %164 = vmatpush1.msra.mxu0 %v133
    %165 = vmatprep.subr.mxu0 0.0
    %166 = vmatpush1.msra.mxu0 %v134
    %167 = vmatprep.subr.mxu0 0.0
    %168 = vmatpush1.msra.mxu0 %v135
    %169 = vmatprep.subr.mxu0 0.0
    %170 = vmatpush1.msra.mxu0 %v136
    %171 = vmatprep.subr.mxu0 0.0
    %172 = vmatpush1.msra.mxu0 %v137
    %173 = vmatprep.subr.mxu0 0.0
    %174 = vmatpush1.msra.mxu0 %v138
    %175 = vmatprep.subr.mxu0 0.0
    %176 = vmatpush1.msra.mxu0 %v139
    %177 = vmatprep.subr.mxu0 0.0
    %178 = vmatpush1.msra.mxu0 %v140
    %179 = vmatprep.subr.mxu0 0.0
    %180 = vmatpush1.msra.mxu0 %v141
    %181 = vmatprep.subr.mxu0 0.0
    %182 = vmatpush1.msra.mxu0 %v142
    %183 = vmatprep.subr.mxu0 0.0
    %184 = vmatpush1.msra.mxu0 0.0
    %185 = vmatprep.subr.mxu0 0.0
    %186 = vmatpush1.msra.mxu0 0.0
    %187 = vmatprep.subr.mxu0 0.0
    %188 = vmatpush1.msra.mxu0 0.0
    %189 = vmatprep.subr.mxu0 0.0
    %190 = vmatpush1.msra.mxu0 0.0
    %191 = vmatprep.subr.mxu0 0.0
    %192 = vmatpush1.msra.mxu0 0.0
    %193 = vmatprep.subr.mxu0 0.0
    %194 = vmatpush1.msra.mxu0 0.0
    %195 = vmatprep.subr.mxu0 0.0
    %196 = vmatpush1.msra.mxu0 0.0
    %197 = vmatprep.subr.mxu0 0.0
    %198 = vmatpush1.msra.mxu0 0.0
    %199 = vmatprep.subr.mxu0 0.0
    %200 = vmatpush1.msra.mxu0 0.0
    %201 = vmatprep.subr.mxu0 0.0
    %202 = vmatpush1.msra.mxu0 0.0
    %203 = vmatprep.subr.mxu0 0.0
    %204 = vmatpush1.msra.mxu0 0.0
    %205 = vmatprep.subr.mxu0 0.0
    %206 = vmatpush1.msra.mxu0 0.0
    %207 = vmatprep.subr.mxu0 0.0
    %208 = vmatpush1.msra.mxu0 0.0
    %209 = vmatprep.subr.mxu0 0.0
    %210 = vmatpush1.msra.mxu0 0.0
    %211 = vmatprep.subr.mxu0 0.0
    %212 = vmatpush1.msra.mxu0 0.0
    %213 = vmatprep.subr.mxu0 0.0
    %214 = vmatpush1.msra.mxu0 0.0
    %215 = vmatprep.mubr.f32.mxu0 0.0
    %216 = vmatmul.mubr.f32.gmra.mrb[0].mxu0 %v125
    %v217 = vpop.f32.mrb[0].mxu0
    %v218 = vadd.f32 %v149, %v217
    %v219 = vpop.f32.mrb[0].mxu0
    %220 = vdwg.mxu0
    %v221 = vmax.f32 %v218, 0.0
    %s222 = scalar_lea.vmem [#allocation5], 256
    %v223 = vld [vmem:[%s222] sm:$0xff]
    %v224 = vld [vmem:[%s222 + $0x8] sm:$0xff]
    %v225 = vld [vmem:[%s222 + $0x10] sm:$0xff]
    %v226 = vld [vmem:[%s222 + $0x18] sm:$0xff]
    %v227 = vld [vmem:[%s222 + $0x20] sm:$0xff]
    %v228 = vld [vmem:[%s222 + $0x28] sm:$0xff]
    %v229 = vld [vmem:[%s222 + $0x30] sm:$0xff]
    %v230 = vld [vmem:[%s222 + $0x38] sm:$0xff]
    %v231 = vld [vmem:[%s222 + $0x40] sm:$0xff]
    %v232 = vld [vmem:[%s222 + $0x48] sm:$0xff]
    %v233 = vld [vmem:[%s222 + $0x50] sm:$0xff]
    %v234 = vld [vmem:[%s222 + $0x58] sm:$0xff]
    %v235 = vld [vmem:[%s222 + $0x60] sm:$0xff]
    %v236 = vld [vmem:[%s222 + $0x68] sm:$0xff]
    %v237 = vld [vmem:[%s222 + $0x70] sm:$0xff]
    %v238 = vld [vmem:[%s222 + $0x78] sm:$0xff]
    %s239 = scalar_lea.vmem %s2, 2
    %v240 = vld [vmem:[%s239] sm:$0x1]
    %v242 = vlaneseq
    %v243 = vshrl.u32 %v242, 7
    %v244 = vsub.s32 0, %v243
    %v245 = vrot.slane %v240, %v244
    %247 = vmatprep.subr.mxu0 0.0
    %248 = vmatpush1.msra.mxu0 %v223
    %249 = vmatprep.subr.mxu0 0.0
    %250 = vmatpush1.msra.mxu0 %v224
    %251 = vmatprep.subr.mxu0 0.0
    %252 = vmatpush1.msra.mxu0 %v225
    %253 = vmatprep.subr.mxu0 0.0
    %254 = vmatpush1.msra.mxu0 %v226
    %255 = vmatprep.subr.mxu0 0.0
    %256 = vmatpush1.msra.mxu0 %v227
    %257 = vmatprep.subr.mxu0 0.0
    %258 = vmatpush1.msra.mxu0 %v228
    %259 = vmatprep.subr.mxu0 0.0
    %260 = vmatpush1.msra.mxu0 %v229
    %261 = vmatprep.subr.mxu0 0.0
    %262 = vmatpush1.msra.mxu0 %v230
    %263 = vmatprep.subr.mxu0 0.0
    %264 = vmatpush1.msra.mxu0 %v231
    %265 = vmatprep.subr.mxu0 0.0
    %266 = vmatpush1.msra.mxu0 %v232
    %267 = vmatprep.subr.mxu0 0.0
    %268 = vmatpush1.msra.mxu0 %v233
    %269 = vmatprep.subr.mxu0 0.0
    %270 = vmatpush1.msra.mxu0 %v234
    %271 = vmatprep.subr.mxu0 0.0
    %272 = vmatpush1.msra.mxu0 %v235
    %273 = vmatprep.subr.mxu0 0.0
    %274 = vmatpush1.msra.mxu0 %v236
    %275 = vmatprep.subr.mxu0 0.0
    %276 = vmatpush1.msra.mxu0 %v237
    %277 = vmatprep.subr.mxu0 0.0
    %278 = vmatpush1.msra.mxu0 %v238
    %279 = vmatprep.subr.mxu0 0.0
    %280 = vmatpush1.msra.mxu0 0.0
    %281 = vmatprep.subr.mxu0 0.0
    %282 = vmatpush1.msra.mxu0 0.0
    %283 = vmatprep.subr.mxu0 0.0
    %284 = vmatpush1.msra.mxu0 0.0
    %285 = vmatprep.subr.mxu0 0.0
    %286 = vmatpush1.msra.mxu0 0.0
    %287 = vmatprep.subr.mxu0 0.0
    %288 = vmatpush1.msra.mxu0 0.0
    %289 = vmatprep.subr.mxu0 0.0
    %290 = vmatpush1.msra.mxu0 0.0
    %291 = vmatprep.subr.mxu0 0.0
    %292 = vmatpush1.msra.mxu0 0.0
    %293 = vmatprep.subr.mxu0 0.0
    %294 = vmatpush1.msra.mxu0 0.0
    %295 = vmatprep.subr.mxu0 0.0
    %296 = vmatpush1.msra.mxu0 0.0
    %297 = vmatprep.subr.mxu0 0.0
    %298 = vmatpush1.msra.mxu0 0.0
    %299 = vmatprep.subr.mxu0 0.0
    %300 = vmatpush1.msra.mxu0 0.0
    %301 = vmatprep.subr.mxu0 0.0
    %302 = vmatpush1.msra.mxu0 0.0
    %303 = vmatprep.subr.mxu0 0.0
    %304 = vmatpush1.msra.mxu0 0.0
    %305 = vmatprep.subr.mxu0 0.0
    %306 = vmatpush1.msra.mxu0 0.0
    %307 = vmatprep.subr.mxu0 0.0
    %308 = vmatpush1.msra.mxu0 0.0
    %309 = vmatprep.subr.mxu0 0.0
    %310 = vmatpush1.msra.mxu0 0.0
    %311 = vmatprep.mubr.f32.mxu0 0.0
    %312 = vmatmul.mubr.f32.gmra.mrb[0].mxu0 %v221
    %v313 = vpop.f32.mrb[0].mxu0
    %v314 = vadd.f32 %v245, %v313
    %v315 = vpop.f32.mrb[0].mxu0
    %316 = vdwg.mxu0
    %v317 = vxor.u32 %v314, 2147483648
    %v318 = vmul.f32 %v317, 1.442695
    %v319 = vpow.pop %v318
    %v320 = vadd.f32 %v319, 1.0
    %v321 = vrcp.pop %v320
    %v322 = vmul.f32 1.0, %v321
    %323 = vst [vmem:[#allocation7] sm:$0xff] %v322
    // Predicated region
    $region22: #{tpu_custom_call.1} parent=1 // pred_check
      _
    $region23: #{tpu_custom_call.1} parent=1 // pred_check_branch
      %325 = sbr.rel (0) target = $region25
    $region24: #{tpu_custom_call.1} parent=1 // pred_region
      %s327 = ssub.s32 128, 128
      %328 = vsyncadd [#allocation4], %s327
      %s330 = sshll.u32 [#allocation7], 4
      %s331 = int_to_ptr.vmem [resolvable:$true] %s330
      %333 = dma.vmem_to_hbm [thread:$0]  %s331, 128, %s3, [#allocation4]
    $region25: #{tpu_custom_call.1} parent=1 // pred_fallthru
      _
    // Predicated region
    $region26: #{tpu_custom_call.1} parent=1 // pred_check
      _
    $region27: #{tpu_custom_call.1} parent=1 // pred_check_branch
      %335 = sbr.rel (0) target = $region29
    $region28: #{tpu_custom_call.1} parent=1 // pred_region
      %336 = dma.done [#allocation4], 128
    $region29: #{tpu_custom_call.1} parent=1 // pred_fallthru
      _
    %337 = vsyncpa [#allocation3], 1
    %338 = vsyncpa [#allocation6], 1
    %339 = vsyncpa [#allocation4], 1

</llo_original>
